<compile_context>
chip_gen: v7x
topology: tpu7x:2x2x1
jax: 0.10.0
libtpu: 0.0.40
codegen_flags: <defaults>
</compile_context>

<pallas_src>
import jax
import jax.numpy as jnp
from jax.experimental import pallas as pl
from jax.experimental.pallas import tpu as pltpu

LANES = 1024                     # lane-dense last dim (8 * 128)
MAX_TILE_ROWS = 1024             # 1024 * 1024 * 4 B = 4 MiB per f32 tile
SUBLANE_MULT = 32                # covers f32(8) / bf16(16) / int8&fp8(32) packing
SMALL_INPUT_ELEMS = 256 * 1024   # below this, plain JAX (launch overhead dominates)
VMEM_LIMIT_BYTES = 32 * 1024 * 1024


def _round_up(x, m):
    return ((x + m - 1) // m) * m


def mlp_kernel(w_ref, b_ref, x_ref, o_ref):
    # w_ref / b_ref: (1,) scalars in SMEM; x_ref / o_ref: (tile_rows, LANES)
    # VMEM tiles.  One FMA per element -> trivially VPU-light, HBM-bound.
    o_ref[...] = x_ref[...] * w_ref[0] + b_ref[0]


def mlp_forward(x, weight, bias, *, min_pallas_elems=SMALL_INPUT_ELEMS):
    """nn.Linear(1, 1): y = x * weight[0, 0] + bias[0], same shape/dtype as x."""
    orig_shape = x.shape
    dtype = x.dtype
    total = x.size

    w_flat = weight.reshape(1).astype(dtype)
    b_flat = bias.reshape(1).astype(dtype)

    # Tiny inputs: one fused XLA affine beats the fixed pallas_call launch cost.
    if total < min_pallas_elems:
        return x * w_flat[0] + b_flat[0]

    # Lane-dense (rows, LANES) view.  Pad only up to the next multiple of LANES;
    # the partial final row-block (if any) is masked by Pallas.
    rows = max(1, pl.cdiv(total, LANES))
    padded_total = rows * LANES

    x_flat = jnp.ravel(x)
    if padded_total != total:
        x_flat = jnp.pad(x_flat, (0, padded_total - total))
    x2d = x_flat.reshape(rows, LANES)

    if rows <= SUBLANE_MULT:
        tile_rows = rows  # block == full array extent: always a legal block shape
    else:
        tile_rows = min(MAX_TILE_ROWS, _round_up(rows, SUBLANE_MULT))
        # v7x has 2 TensorCores: keep >= 2 grid steps whenever possible.
        if pl.cdiv(rows, tile_rows) < 2:
            tile_rows = _round_up(pl.cdiv(rows, 2), SUBLANE_MULT)
    grid = (pl.cdiv(rows, tile_rows),)

    itemsize = jnp.dtype(dtype).itemsize
    out2d = pl.pallas_call(
        mlp_kernel,
        out_shape=jax.ShapeDtypeStruct((rows, LANES), dtype),
        grid=grid,
        in_specs=[
            pl.BlockSpec(memory_space=pltpu.MemorySpace.SMEM),   # weight scalar
            pl.BlockSpec(memory_space=pltpu.MemorySpace.SMEM),   # bias scalar
            pl.BlockSpec((tile_rows, LANES), lambda i: (i, 0)),  # x tile
        ],
        out_specs=pl.BlockSpec((tile_rows, LANES), lambda i: (i, 0)),
        compiler_params=pltpu.CompilerParams(
            dimension_semantics=("parallel",),
            vmem_limit_bytes=VMEM_LIMIT_BYTES,
            allow_input_fusion=(False, False, True),  # fuse producer pad into x
        ),
        cost_estimate=pl.CostEstimate(
            flops=2 * padded_total,
            transcendentals=0,
            bytes_accessed=2 * padded_total * itemsize,
        ),
    )(w_flat, b_flat, x2d)

    if padded_total != total:
        return out2d.reshape(-1)[:total].reshape(orig_shape)
    return out2d.reshape(orig_shape)


if __name__ == "__main__":
    key = jax.random.PRNGKey(0)
    kx, kw, kb, kx2 = jax.random.split(key, 4)

    # PyTorch Linear(1, 1) init: U(-1/sqrt(fan_in), 1/sqrt(fan_in)), fan_in = 1.
    weight = jax.random.uniform(kw, (1, 1), dtype=jnp.float32, minval=-1.0, maxval=1.0)
    bias = jax.random.uniform(kb, (1,), dtype=jnp.float32, minval=-1.0, maxval=1.0)

    # Small batch, 1 input feature — the shape Linear(1, 1) implies.  Force the
    # Pallas path (default would take the tiny-input JAX fallback).
    x_small = jax.random.normal(kx, (8, 1), dtype=jnp.float32)
    out_small = jax.block_until_ready(
        mlp_forward(x_small, weight, bias, min_pallas_elems=0))
    ref_small = x_small @ weight.T + bias
    assert out_small.shape == (8, 1) and out_small.dtype == jnp.float32
    assert jnp.allclose(out_small, ref_small, atol=1e-6, rtol=1e-6)

    # A batch that is a whole number of lane-rows: exercises the zero-copy
    # (no pad / no slice) path through the kernel.
    x_mid = jax.random.normal(kx2, (2048, 1), dtype=jnp.float32)
    out_mid = jax.block_until_ready(
        mlp_forward(x_mid, weight, bias, min_pallas_elems=0))
    ref_mid = x_mid @ weight.T + bias
    assert jnp.allclose(out_mid, ref_mid, atol=1e-6, rtol=1e-6)

    # Default tiny-input fallback (pure JAX) still matches.
    out_fb = jax.block_until_ready(mlp_forward(x_small, weight, bias))
    assert jnp.allclose(out_fb, ref_small, atol=1e-6, rtol=1e-6)

    print("KERNEL_OK")
</pallas_src>

<mosaic_0001>
module attributes {stable_mosaic.version = 11 : i64} {
  func.func @mlp_kernel(%arg0: i32, %arg1: memref<1xf32, #tpu.memory_space<smem>>, %arg2: memref<1xf32, #tpu.memory_space<smem>>, %arg3: memref<1x1024xf32, #tpu.memory_space<vmem>>, %arg4: memref<1x1024xf32, #tpu.memory_space<vmem>>) attributes {dimension_semantics = [#tpu.dimension_semantics<parallel>], iteration_bounds = array<i64: 1>, scalar_prefetch = 0 : i64, scratch_operands = 0 : i64, tpu.core_type = #tpu.core_type<tc>, window_params = [{transform_indices = @transform_0, window_bounds = array<i64: 1>}, {transform_indices = @transform_1, window_bounds = array<i64: 1>}, {transform_indices = @transform_2, window_bounds = array<i64: 1, 1024>}, {transform_indices = @transform_3, window_bounds = array<i64: 1, 1024>}]} {
    %c0 = arith.constant 0 : index
    %c0_0 = arith.constant 0 : index
    %0 = vector.load %arg3[%c0, %c0_0] : memref<1x1024xf32, #tpu.memory_space<vmem>>, vector<1x1024xf32>
    %c0_1 = arith.constant 0 : index
    %1 = memref.load %arg1[%c0_1] : memref<1xf32, #tpu.memory_space<smem>>
    %2 = vector.broadcast %1 : f32 to vector<1x1024xf32>
    %3 = arith.mulf %0, %2 : vector<1x1024xf32>
    %c0_2 = arith.constant 0 : index
    %4 = memref.load %arg2[%c0_2] : memref<1xf32, #tpu.memory_space<smem>>
    %5 = vector.broadcast %4 : f32 to vector<1x1024xf32>
    %6 = arith.addf %3, %5 : vector<1x1024xf32>
    %c0_3 = arith.constant 0 : index
    %c0_4 = arith.constant 0 : index
    %7 = vector.load %arg4[%c0_3, %c0_4] : memref<1x1024xf32, #tpu.memory_space<vmem>>, vector<1x1024xf32>
    tpu.vector_store %arg4[%c0_3, %c0_4], %6 {strides = array<i32>} : memref<1x1024xf32, #tpu.memory_space<vmem>>, vector<1x1024xf32>,
    return
  }
  func.func @transform_0(%arg0: i32) -> i32 {
    %c0_i32 = arith.constant 0 : i32
    %c0_i32_0 = arith.constant 0 : i32
    return %c0_i32 : i32
  }
  func.func @transform_1(%arg0: i32) -> i32 {
    %c0_i32 = arith.constant 0 : i32
    %c0_i32_0 = arith.constant 0 : i32
    return %c0_i32 : i32
  }
  func.func @transform_2(%arg0: i32) -> (i32, i32) {
    %c0_i32 = arith.constant 0 : i32
    %c0_i32_0 = arith.constant 0 : i32
    return %arg0, %c0_i32 : i32, i32
  }
  func.func @transform_3(%arg0: i32) -> (i32, i32) {
    %c0_i32 = arith.constant 0 : i32
    %c0_i32_0 = arith.constant 0 : i32
    return %arg0, %c0_i32 : i32, i32
  }
}

</mosaic_0001>

<llo_original>
// kernel: tpu_custom_call.1
$region0: #{tpu_custom_call.1}
  #allocation0 [shape = 'u32[]', space=smem, size = 0x4, offset = 0x4, fixed_abs, tag = 'smem constant byte address 0x4 - core index']
  #allocation1 [shape = 'u32[144,128]{1,0:T(1,128)}', space=vmem, size = 0x12000, scoped, tag = 'internal scratch']
  #allocation2 [shape = 'f32[1]{0:T(128)S(6)}', space=smem, size = 0x200, scoped, tag = 'scoped memory for tpu_custom_call.1']
  #allocation3 [shape = 'f32[1]{0:T(128)S(6)}', space=smem, size = 0x200, scoped, tag = 'scoped memory for tpu_custom_call.1']
  %s0 = inlined_call_operand.<no memory space> [shape: f32[1], index: 0, kind: input, shape index: {}]
  %s1 = inlined_call_operand.<no memory space> [shape: f32[1], index: 1, kind: input, shape index: {}]
  %s2 = inlined_call_operand.hbm [shape: f32[1,1024], index: 2, kind: input, shape index: {}]
  %s3 = inlined_call_operand.hbm [shape: f32[1,1024], index: 3, kind: output, shape index: {}]
  %s4 = sld [smem:[#allocation0]]
  $region26: #{tpu_custom_call.1} parent=0
    _
  %s6 = ssub.s32 1, %s4
  %s7 = scalar_select 0, %s6, %s4
  %8 = sst [smem:[#allocation2]] %s0
  %9 = sst [smem:[#allocation3]] %s1
  $region1: #{tpu_custom_call.1} parent=0
    #allocation4 [shape = 'u8[4096]{0}', space=vmem, size = 0x1000, scoped, tag = 'input window, operand 2, single buffered']
    #allocation5 [shape = 's32[1]{0}', space=sflag, size = 0x4, scoped, tag = 'scoped memory for tpu_custom_call.1']
    #allocation6 [shape = 's32[1]{0}', space=sflag, size = 0x4, scoped, tag = 'scoped memory for tpu_custom_call.1']
    #allocation7 [shape = 'u8[4096]{0}', space=vmem, size = 0x1000, scoped, tag = 'output window, operand 0, single buffered']
    %10 = vsyncpa [#allocation5], 0
    %11 = vsyncpa [#allocation6], 0
    // Predicated region
    $region2: #{tpu_custom_call.1} parent=1 // pred_check
      _
    $region3: #{tpu_custom_call.1} parent=1 // pred_check_branch
      %13 = sbr.rel (0) target = $region5
    $region4: #{tpu_custom_call.1} parent=1 // pred_region
      _
    $region5: #{tpu_custom_call.1} parent=1 // pred_fallthru
      _
    // Predicated region
    $region6: #{tpu_custom_call.1} parent=1 // pred_check
      _
    $region7: #{tpu_custom_call.1} parent=1 // pred_check_branch
      %15 = sbr.rel (0) target = $region9
    $region8: #{tpu_custom_call.1} parent=1 // pred_region
      _
    $region9: #{tpu_custom_call.1} parent=1 // pred_fallthru
      _
    // Predicated region
    $region10: #{tpu_custom_call.1} parent=1 // pred_check
      _
    $region11: #{tpu_custom_call.1} parent=1 // pred_check_branch
      %17 = sbr.rel (0) target = $region13
    $region12: #{tpu_custom_call.1} parent=1 // pred_region
      %s19 = ssub.s32 128, 128
      %20 = vsyncadd [#allocation5], %s19
      %s22 = sshll.u32 [#allocation4], 4
      %s23 = int_to_ptr.vmem [resolvable:$true] %s22
      %25 = dma.hbm_to_vmem [thread:$0]  %s2, 128, %s23, [#allocation5]
    $region13: #{tpu_custom_call.1} parent=1 // pred_fallthru
      _
    // Predicated region
    $region14: #{tpu_custom_call.1} parent=1 // pred_check
      _
    $region15: #{tpu_custom_call.1} parent=1 // pred_check_branch
      %27 = sbr.rel (0) target = $region17
    $region16: #{tpu_custom_call.1} parent=1 // pred_region
      %28 = dma.done [#allocation5], 128
    $region17: #{tpu_custom_call.1} parent=1 // pred_fallthru
      _
    %v29 = vld [vmem:[#allocation4] sm:$0xff]
    %s30 = sld [smem:[#allocation2]]
    %v31 = vstv %s30
    %v32 = vmul.f32 %v29, %v31
    %s33 = sld [smem:[#allocation3]]
    %v34 = vstv %s33
    %v35 = vadd.f32 %v32, %v34
    %36 = vst [vmem:[#allocation7] sm:$0xff] %v35
    // Predicated region
    $region18: #{tpu_custom_call.1} parent=1 // pred_check
      _
    $region19: #{tpu_custom_call.1} parent=1 // pred_check_branch
      %38 = sbr.rel (0) target = $region21
    $region20: #{tpu_custom_call.1} parent=1 // pred_region
      %s40 = ssub.s32 128, 128
      %41 = vsyncadd [#allocation6], %s40
      %s43 = sshll.u32 [#allocation7], 4
      %s44 = int_to_ptr.vmem [resolvable:$true] %s43
      %46 = dma.vmem_to_hbm [thread:$0]  %s44, 128, %s3, [#allocation6]
    $region21: #{tpu_custom_call.1} parent=1 // pred_fallthru
      _
    // Predicated region
    $region22: #{tpu_custom_call.1} parent=1 // pred_check
      _
    $region23: #{tpu_custom_call.1} parent=1 // pred_check_branch
      %48 = sbr.rel (0) target = $region25
    $region24: #{tpu_custom_call.1} parent=1 // pred_region
      %49 = dma.done [#allocation6], 128
    $region25: #{tpu_custom_call.1} parent=1 // pred_fallthru
      _
    %50 = vsyncpa [#allocation5], 1
    %51 = vsyncpa [#allocation6], 1

</llo_original>
